<compile_context>
chip_gen: v6e
topology: v6e:2x2x1
jax: 0.10.0
libtpu: 0.0.40
codegen_flags: <defaults>
</compile_context>

<pallas_src>
import jax
import jax.numpy as jnp
from jax import lax
from jax.experimental import pallas as pl
from jax.experimental.pallas import tpu as pltpu  # noqa: F401


def rnn_kernel(x_ref, wih_ref, bih_ref, whh_ref, bhh_ref, wfc_ref, bfc_ref,
               y_ref):
    # x_ref:   (Bp, T)   input sequence (input_size == 1 -> scalar per step),
    #                    batch on sublanes, time on lanes
    # wih_ref: (1, H)    W_ih as a row vector (input_size = 1)
    # bih_ref: (1, H)    b_ih
    # whh_ref: (H, H)    W_hh (untransposed; NT contraction below)
    # bhh_ref: (1, H)    b_hh
    # wfc_ref: (1, H)    W_fc (untransposed)
    # bfc_ref: (1, 1)    b_fc
    # y_ref:   (1, Bp)   lane-dense output (batch on the lane axis)
    Bp, T = x_ref.shape

    x = x_ref[...]                           # (Bp, T)
    wih = wih_ref[...]                       # (1, H)
    bias = bih_ref[...] + bhh_ref[...]       # (1, H), hoisted out of the loop
    whh = whh_ref[...]                       # (H, H), loaded once

    # t = 0: h_prev == 0, so skip the recurrence matmul.
    h = jnp.tanh(x[:, 0:1] * wih + bias)     # (Bp, H), lives in vregs

    # Fully unrolled: T is compile-time static, so the LLO scheduler can
    # overlap the MXU push/pop of step t with the VPU add / EUP tanh of t-1.
    for t in range(1, T):
        xp = x[:, t:t + 1] * wih + bias                          # (Bp, H)
        hh = lax.dot_general(h, whh, (((1,), (1,)), ((), ())),   # h @ W_hh^T
                             preferred_element_type=jnp.float32)
        h = jnp.tanh(xp + hh)

    # FC head: W_fc @ h^T -> (1, Bp); store lane-dense.
    y = lax.dot_general(wfc_ref[...], h, (((1,), (1,)), ((), ())),
                        preferred_element_type=jnp.float32)
    y_ref[...] = y + bfc_ref[...]


def rnn_forward(x, params):
    """x: (B, T, 1) float32 -> (B, 1) float32 (matches the PyTorch forward)."""
    B, T, I = x.shape
    assert I == 1 and T >= 1
    H = params["w_hh"].shape[0]

    # Pad batch to a sublane multiple (>= 8) so the MXU LHS isn't a 2-row tile.
    Bp = max(8, ((B + 7) // 8) * 8)
    x_bt = x[:, :, 0]                                  # (B, T) — no transpose
    if Bp != B:
        x_bt = jnp.pad(x_bt, ((0, Bp - B), (0, 0)))

    wih = params["w_ih"].reshape(1, H)                 # W_ih is (H, 1) -> (1, H)
    bih = params["b_ih"].reshape(1, H)
    whh = params["w_hh"]                               # (H, H), untransposed
    bhh = params["b_hh"].reshape(1, H)
    wfc = params["w_fc"].reshape(1, H)                 # (1, H), untransposed
    bfc = params["b_fc"].reshape(1, 1)

    y_lane = pl.pallas_call(
        rnn_kernel,
        out_shape=jax.ShapeDtypeStruct((1, Bp), jnp.float32),
    )(x_bt, wih, bih, whh, bhh, wfc, bfc)

    return jnp.transpose(y_lane[:, :B], (1, 0))        # (B, 1)


def init_params(key, hidden=20):
    # PyTorch-style uniform(-1/sqrt(H), 1/sqrt(H)) init, deterministic via PRNGKey.
    ks = jax.random.split(key, 6)
    s = 1.0 / jnp.sqrt(jnp.float32(hidden))
    u = lambda k, shape: jax.random.uniform(k, shape, jnp.float32, -s, s)
    return {
        "w_ih": u(ks[0], (hidden, 1)),
        "w_hh": u(ks[1], (hidden, hidden)),
        "b_ih": u(ks[2], (hidden,)),
        "b_hh": u(ks[3], (hidden,)),
        "w_fc": u(ks[4], (1, hidden)),
        "b_fc": u(ks[5], (1,)),
    }


def rnn_forward_ref(x, params):
    """Pure-JAX reference of the same forward pass (for a sanity check)."""
    B, T, _ = x.shape
    H = params["w_hh"].shape[0]
    h = jnp.zeros((B, H), jnp.float32)
    for t in range(T):
        pre = (x[:, t] @ params["w_ih"].T + params["b_ih"]
               + h @ params["w_hh"].T + params["b_hh"])
        h = jnp.tanh(pre)
    return h @ params["w_fc"].T + params["b_fc"]


if __name__ == "__main__":
    key = jax.random.PRNGKey(0)
    kx, kp = jax.random.split(key)

    B, T, H = 2, 8, 20
    x = jax.random.normal(kx, (B, T, 1), jnp.float32)
    params = init_params(kp, hidden=H)

    y = rnn_forward(x, params)
    y = jax.block_until_ready(y)

    y_ref = rnn_forward_ref(x, params)
    assert y.shape == (B, 1)
    assert jnp.allclose(y, y_ref, atol=1e-5, rtol=1e-5)

    print("KERNEL_OK")
</pallas_src>

<mosaic_0001>
module attributes {stable_mosaic.version = 11 : i64} {
  func.func @rnn_kernel(%arg0: memref<8x8xf32, #tpu.memory_space<vmem>>, %arg1: memref<1x20xf32, #tpu.memory_space<vmem>>, %arg2: memref<1x20xf32, #tpu.memory_space<vmem>>, %arg3: memref<20x20xf32, #tpu.memory_space<vmem>>, %arg4: memref<1x20xf32, #tpu.memory_space<vmem>>, %arg5: memref<1x20xf32, #tpu.memory_space<vmem>>, %arg6: memref<1x1xf32, #tpu.memory_space<vmem>>, %arg7: memref<1x8xf32, #tpu.memory_space<vmem>>) attributes {dimension_semantics = [], scalar_prefetch = 0 : i64, scratch_operands = 0 : i64, tpu.core_type = #tpu.core_type<tc>} {
    %c0 = arith.constant 0 : index
    %c0_0 = arith.constant 0 : index
    %0 = vector.load %arg0[%c0, %c0_0] : memref<8x8xf32, #tpu.memory_space<vmem>>, vector<8x8xf32>
    %c0_1 = arith.constant 0 : index
    %c0_2 = arith.constant 0 : index
    %1 = vector.load %arg1[%c0_1, %c0_2] : memref<1x20xf32, #tpu.memory_space<vmem>>, vector<1x20xf32>
    %c0_3 = arith.constant 0 : index
    %c0_4 = arith.constant 0 : index
    %2 = vector.load %arg2[%c0_3, %c0_4] : memref<1x20xf32, #tpu.memory_space<vmem>>, vector<1x20xf32>
    %c0_5 = arith.constant 0 : index
    %c0_6 = arith.constant 0 : index
    %3 = vector.load %arg4[%c0_5, %c0_6] : memref<1x20xf32, #tpu.memory_space<vmem>>, vector<1x20xf32>
    %4 = arith.addf %2, %3 : vector<1x20xf32>
    %c0_7 = arith.constant 0 : index
    %c0_8 = arith.constant 0 : index
    %5 = vector.load %arg3[%c0_7, %c0_8] : memref<20x20xf32, #tpu.memory_space<vmem>>, vector<20x20xf32>
    %6 = vector.extract_strided_slice %0 {offsets = [0, 0], sizes = [8, 1], strides = [1, 1]} : vector<8x8xf32> to vector<8x1xf32>
    %7 = vector.broadcast %6 : vector<8x1xf32> to vector<8x20xf32>
    %8 = vector.broadcast %1 : vector<1x20xf32> to vector<8x20xf32>
    %9 = arith.mulf %7, %8 : vector<8x20xf32>
    %10 = vector.broadcast %4 : vector<1x20xf32> to vector<8x20xf32>
    %11 = arith.addf %9, %10 : vector<8x20xf32>
    %12 = math.tanh %11 : vector<8x20xf32>
    %13 = vector.extract_strided_slice %0 {offsets = [0, 1], sizes = [8, 1], strides = [1, 1]} : vector<8x8xf32> to vector<8x1xf32>
    %14 = vector.broadcast %13 : vector<8x1xf32> to vector<8x20xf32>
    %15 = vector.broadcast %1 : vector<1x20xf32> to vector<8x20xf32>
    %16 = arith.mulf %14, %15 : vector<8x20xf32>
    %17 = vector.broadcast %4 : vector<1x20xf32> to vector<8x20xf32>
    %18 = arith.addf %16, %17 : vector<8x20xf32>
    %cst = arith.constant dense<0.000000e+00> : vector<8x20xf32>
    %19 = tpu.matmul %12, %5, %cst {dimension_numbers = #tpu.dot_dimension_numbers<[1], [1], [0], [0], [0, 0, 1, 0], [], []>} : vector<8x20xf32>, vector<20x20xf32>, vector<8x20xf32> -> vector<8x20xf32>
    %20 = arith.addf %18, %19 : vector<8x20xf32>
    %21 = math.tanh %20 : vector<8x20xf32>
    %22 = vector.extract_strided_slice %0 {offsets = [0, 2], sizes = [8, 1], strides = [1, 1]} : vector<8x8xf32> to vector<8x1xf32>
    %23 = vector.broadcast %22 : vector<8x1xf32> to vector<8x20xf32>
    %24 = vector.broadcast %1 : vector<1x20xf32> to vector<8x20xf32>
    %25 = arith.mulf %23, %24 : vector<8x20xf32>
    %26 = vector.broadcast %4 : vector<1x20xf32> to vector<8x20xf32>
    %27 = arith.addf %25, %26 : vector<8x20xf32>
    %cst_9 = arith.constant dense<0.000000e+00> : vector<8x20xf32>
    %28 = tpu.matmul %21, %5, %cst_9 {dimension_numbers = #tpu.dot_dimension_numbers<[1], [1], [0], [0], [0, 0, 1, 0], [], []>} : vector<8x20xf32>, vector<20x20xf32>, vector<8x20xf32> -> vector<8x20xf32>
    %29 = arith.addf %27, %28 : vector<8x20xf32>
    %30 = math.tanh %29 : vector<8x20xf32>
    %31 = vector.extract_strided_slice %0 {offsets = [0, 3], sizes = [8, 1], strides = [1, 1]} : vector<8x8xf32> to vector<8x1xf32>
    %32 = vector.broadcast %31 : vector<8x1xf32> to vector<8x20xf32>
    %33 = vector.broadcast %1 : vector<1x20xf32> to vector<8x20xf32>
    %34 = arith.mulf %32, %33 : vector<8x20xf32>
    %35 = vector.broadcast %4 : vector<1x20xf32> to vector<8x20xf32>
    %36 = arith.addf %34, %35 : vector<8x20xf32>
    %cst_10 = arith.constant dense<0.000000e+00> : vector<8x20xf32>
    %37 = tpu.matmul %30, %5, %cst_10 {dimension_numbers = #tpu.dot_dimension_numbers<[1], [1], [0], [0], [0, 0, 1, 0], [], []>} : vector<8x20xf32>, vector<20x20xf32>, vector<8x20xf32> -> vector<8x20xf32>
    %38 = arith.addf %36, %37 : vector<8x20xf32>
    %39 = math.tanh %38 : vector<8x20xf32>
    %40 = vector.extract_strided_slice %0 {offsets = [0, 4], sizes = [8, 1], strides = [1, 1]} : vector<8x8xf32> to vector<8x1xf32>
    %41 = vector.broadcast %40 : vector<8x1xf32> to vector<8x20xf32>
    %42 = vector.broadcast %1 : vector<1x20xf32> to vector<8x20xf32>
    %43 = arith.mulf %41, %42 : vector<8x20xf32>
    %44 = vector.broadcast %4 : vector<1x20xf32> to vector<8x20xf32>
    %45 = arith.addf %43, %44 : vector<8x20xf32>
    %cst_11 = arith.constant dense<0.000000e+00> : vector<8x20xf32>
    %46 = tpu.matmul %39, %5, %cst_11 {dimension_numbers = #tpu.dot_dimension_numbers<[1], [1], [0], [0], [0, 0, 1, 0], [], []>} : vector<8x20xf32>, vector<20x20xf32>, vector<8x20xf32> -> vector<8x20xf32>
    %47 = arith.addf %45, %46 : vector<8x20xf32>
    %48 = math.tanh %47 : vector<8x20xf32>
    %49 = vector.extract_strided_slice %0 {offsets = [0, 5], sizes = [8, 1], strides = [1, 1]} : vector<8x8xf32> to vector<8x1xf32>
    %50 = vector.broadcast %49 : vector<8x1xf32> to vector<8x20xf32>
    %51 = vector.broadcast %1 : vector<1x20xf32> to vector<8x20xf32>
    %52 = arith.mulf %50, %51 : vector<8x20xf32>
    %53 = vector.broadcast %4 : vector<1x20xf32> to vector<8x20xf32>
    %54 = arith.addf %52, %53 : vector<8x20xf32>
    %cst_12 = arith.constant dense<0.000000e+00> : vector<8x20xf32>
    %55 = tpu.matmul %48, %5, %cst_12 {dimension_numbers = #tpu.dot_dimension_numbers<[1], [1], [0], [0], [0, 0, 1, 0], [], []>} : vector<8x20xf32>, vector<20x20xf32>, vector<8x20xf32> -> vector<8x20xf32>
    %56 = arith.addf %54, %55 : vector<8x20xf32>
    %57 = math.tanh %56 : vector<8x20xf32>
    %58 = vector.extract_strided_slice %0 {offsets = [0, 6], sizes = [8, 1], strides = [1, 1]} : vector<8x8xf32> to vector<8x1xf32>
    %59 = vector.broadcast %58 : vector<8x1xf32> to vector<8x20xf32>
    %60 = vector.broadcast %1 : vector<1x20xf32> to vector<8x20xf32>
    %61 = arith.mulf %59, %60 : vector<8x20xf32>
    %62 = vector.broadcast %4 : vector<1x20xf32> to vector<8x20xf32>
    %63 = arith.addf %61, %62 : vector<8x20xf32>
    %cst_13 = arith.constant dense<0.000000e+00> : vector<8x20xf32>
    %64 = tpu.matmul %57, %5, %cst_13 {dimension_numbers = #tpu.dot_dimension_numbers<[1], [1], [0], [0], [0, 0, 1, 0], [], []>} : vector<8x20xf32>, vector<20x20xf32>, vector<8x20xf32> -> vector<8x20xf32>
    %65 = arith.addf %63, %64 : vector<8x20xf32>
    %66 = math.tanh %65 : vector<8x20xf32>
    %67 = vector.extract_strided_slice %0 {offsets = [0, 7], sizes = [8, 1], strides = [1, 1]} : vector<8x8xf32> to vector<8x1xf32>
    %68 = vector.broadcast %67 : vector<8x1xf32> to vector<8x20xf32>
    %69 = vector.broadcast %1 : vector<1x20xf32> to vector<8x20xf32>
    %70 = arith.mulf %68, %69 : vector<8x20xf32>
    %71 = vector.broadcast %4 : vector<1x20xf32> to vector<8x20xf32>
    %72 = arith.addf %70, %71 : vector<8x20xf32>
    %cst_14 = arith.constant dense<0.000000e+00> : vector<8x20xf32>
    %73 = tpu.matmul %66, %5, %cst_14 {dimension_numbers = #tpu.dot_dimension_numbers<[1], [1], [0], [0], [0, 0, 1, 0], [], []>} : vector<8x20xf32>, vector<20x20xf32>, vector<8x20xf32> -> vector<8x20xf32>
    %74 = arith.addf %72, %73 : vector<8x20xf32>
    %75 = math.tanh %74 : vector<8x20xf32>
    %c0_15 = arith.constant 0 : index
    %c0_16 = arith.constant 0 : index
    %76 = vector.load %arg5[%c0_15, %c0_16] : memref<1x20xf32, #tpu.memory_space<vmem>>, vector<1x20xf32>
    %cst_17 = arith.constant dense<0.000000e+00> : vector<1x8xf32>
    %77 = tpu.matmul %76, %75, %cst_17 {dimension_numbers = #tpu.dot_dimension_numbers<[1], [1], [0], [0], [0, 0, 1, 0], [], []>} : vector<1x20xf32>, vector<8x20xf32>, vector<1x8xf32> -> vector<1x8xf32>
    %c0_18 = arith.constant 0 : index
    %c0_19 = arith.constant 0 : index
    %78 = vector.load %arg6[%c0_18, %c0_19] : memref<1x1xf32, #tpu.memory_space<vmem>>, vector<1x1xf32>
    %79 = vector.broadcast %78 : vector<1x1xf32> to vector<1x8xf32>
    %80 = arith.addf %77, %79 : vector<1x8xf32>
    %c0_20 = arith.constant 0 : index
    %c0_21 = arith.constant 0 : index
    %81 = vector.load %arg7[%c0_20, %c0_21] : memref<1x8xf32, #tpu.memory_space<vmem>>, vector<1x8xf32>
    tpu.vector_store %arg7[%c0_20, %c0_21], %80 {strides = array<i32>} : memref<1x8xf32, #tpu.memory_space<vmem>>, vector<1x8xf32>,
    return
  }
}

</mosaic_0001>

<llo_original>
// kernel: tpu_custom_call.1
$region0: #{tpu_custom_call.1}
  #allocation0 [shape = 'u32[]', space=smem, size = 0x4, offset = 0x4, fixed_abs, tag = 'smem constant byte address 0x4 - core index']
  #allocation1 [shape = 'u32[144,128]{1,0:T(1,128)}', space=vmem, size = 0x12000, scoped, tag = 'internal scratch']
  #allocation2 [shape = 'f32[1,1]{1,0:T(1,128)S(1)}', space=vmem, size = 0x200, scoped, tag = 'scoped memory for tpu_custom_call.1']
  %s0 = inlined_call_operand.hbm [shape: f32[8,8], index: 0, kind: input, shape index: {}]
  %s1 = inlined_call_operand.vmem [shape: f32[1,20], index: 1, kind: input, shape index: {}]
  %s2 = inlined_call_operand.vmem [shape: f32[1,20], index: 2, kind: input, shape index: {}]
  %s3 = inlined_call_operand.hbm [shape: f32[20,20], index: 3, kind: input, shape index: {}]
  %s4 = inlined_call_operand.vmem [shape: f32[1,20], index: 4, kind: input, shape index: {}]
  %s5 = inlined_call_operand.vmem [shape: f32[1,20], index: 5, kind: input, shape index: {}]
  %s6 = inlined_call_operand.<no memory space> [shape: f32[1,1], index: 6, kind: input, shape index: {}]
  %s7 = inlined_call_operand.hbm [shape: f32[1,8], index: 7, kind: output, shape index: {}]
  %s8 = sld [smem:[#allocation0]]
  $region46: #{tpu_custom_call.1} parent=0
    _
  %s10 = ssub.s32 1, %s8
  %s11 = scalar_select 0, %s10, %s8
  %v12 = vstv %s6
  %13 = vst [vmem:[#allocation2] sm:$0x1] %v12
  $region1: #{tpu_custom_call.1} parent=0
    #allocation3 [shape = 'u8[4096]{0}', space=vmem, size = 0x1000, scoped, tag = 'input window, operand 0, single buffered']
    #allocation4 [shape = 's32[1]{0}', space=sflag, size = 0x4, scoped, tag = 'scoped memory for tpu_custom_call.1']
    #allocation5 [shape = 's32[1]{0}', space=sflag, size = 0x4, scoped, tag = 'scoped memory for tpu_custom_call.1']
    #allocation6 [shape = 'u8[12288]{0}', space=vmem, size = 0x3000, scoped, tag = 'input window, operand 3, single buffered']
    #allocation7 [shape = 's32[1]{0}', space=sflag, size = 0x4, scoped, tag = 'scoped memory for tpu_custom_call.1']
    #allocation8 [shape = 'u8[512]{0}', space=vmem, size = 0x400, scoped, tag = 'output window, operand 0, single buffered']
    %14 = vsyncpa [#allocation4], 0
    %15 = vsyncpa [#allocation7], 0
    %16 = vsyncpa [#allocation5], 0
    // Predicated region
    $region2: #{tpu_custom_call.1} parent=1 // pred_check
      _
    $region3: #{tpu_custom_call.1} parent=1 // pred_check_branch
      %18 = sbr.rel (0) target = $region5
    $region4: #{tpu_custom_call.1} parent=1 // pred_region
      %s20 = ssub.s32 128, 128
      %21 = vsyncadd [#allocation4], %s20
      %s23 = sshll.u32 [#allocation3], 4
      %s24 = int_to_ptr.vmem [resolvable:$true] %s23
      %26 = dma.hbm_to_vmem [thread:$0]  %s0, 128, %s24, [#allocation4]
    $region5: #{tpu_custom_call.1} parent=1 // pred_fallthru
      _
    // Predicated region
    $region6: #{tpu_custom_call.1} parent=1 // pred_check
      _
    $region7: #{tpu_custom_call.1} parent=1 // pred_check_branch
      %28 = sbr.rel (0) target = $region9
    $region8: #{tpu_custom_call.1} parent=1 // pred_region
      _
    $region9: #{tpu_custom_call.1} parent=1 // pred_fallthru
      _
    // Predicated region
    $region10: #{tpu_custom_call.1} parent=1 // pred_check
      _
    $region11: #{tpu_custom_call.1} parent=1 // pred_check_branch
      %30 = sbr.rel (0) target = $region13
    $region12: #{tpu_custom_call.1} parent=1 // pred_region
      _
    $region13: #{tpu_custom_call.1} parent=1 // pred_fallthru
      _
    // Predicated region
    $region14: #{tpu_custom_call.1} parent=1 // pred_check
      _
    $region15: #{tpu_custom_call.1} parent=1 // pred_check_branch
      %32 = sbr.rel (0) target = $region17
    $region16: #{tpu_custom_call.1} parent=1 // pred_region
      %s34 = ssub.s32 384, 384
      %35 = vsyncadd [#allocation7], %s34
      %s36 = sshll.u32 [#allocation6], 4
      %s37 = int_to_ptr.vmem [resolvable:$true] %s36
      %42 = dma.hbm_to_vmem [thread:$0]  %s3, 384, %s37, [#allocation7], 128, 128, 8
    $region17: #{tpu_custom_call.1} parent=1 // pred_fallthru
      _
    // Predicated region
    $region18: #{tpu_custom_call.1} parent=1 // pred_check
      _
    $region19: #{tpu_custom_call.1} parent=1 // pred_check_branch
      %44 = sbr.rel (0) target = $region21
    $region20: #{tpu_custom_call.1} parent=1 // pred_region
      _
    $region21: #{tpu_custom_call.1} parent=1 // pred_fallthru
      _
    // Predicated region
    $region22: #{tpu_custom_call.1} parent=1 // pred_check
      _
    $region23: #{tpu_custom_call.1} parent=1 // pred_check_branch
      %46 = sbr.rel (0) target = $region25
    $region24: #{tpu_custom_call.1} parent=1 // pred_region
      _
    $region25: #{tpu_custom_call.1} parent=1 // pred_fallthru
      _
    // Predicated region
    $region26: #{tpu_custom_call.1} parent=1 // pred_check
      _
    $region27: #{tpu_custom_call.1} parent=1 // pred_check_branch
      %48 = sbr.rel (0) target = $region29
    $region28: #{tpu_custom_call.1} parent=1 // pred_region
      _
    $region29: #{tpu_custom_call.1} parent=1 // pred_fallthru
      _
    // Predicated region
    $region30: #{tpu_custom_call.1} parent=1 // pred_check
      _
    $region31: #{tpu_custom_call.1} parent=1 // pred_check_branch
      %50 = sbr.rel (0) target = $region33
    $region32: #{tpu_custom_call.1} parent=1 // pred_region
      %51 = dma.done [#allocation4], 128
    $region33: #{tpu_custom_call.1} parent=1 // pred_fallthru
      _
    // Predicated region
    $region34: #{tpu_custom_call.1} parent=1 // pred_check
      _
    $region35: #{tpu_custom_call.1} parent=1 // pred_check_branch
      %53 = sbr.rel (0) target = $region37
    $region36: #{tpu_custom_call.1} parent=1 // pred_region
      %54 = dma.done [#allocation7], 384
    $region37: #{tpu_custom_call.1} parent=1 // pred_fallthru
      _
    %v55 = vld [vmem:[#allocation3] sm:$0xff]
    %v56 = vld [vmem:[%s1] sm:$0x1]
    %v57 = vld [vmem:[%s2] sm:$0x1]
    %v58 = vld [vmem:[%s4] sm:$0x1]
    %v59 = vadd.f32 %v57, %v58
    %v60 = vld [vmem:[#allocation6] sm:$0xff]
    %v61 = vld [vmem:[#allocation6 + $0x8] sm:$0xff]
    %v62 = vld [vmem:[#allocation6 + $0x10] sm:$0xf]
    %64 = vset.pattern.permute.xlu0 0
    %65 = vperm.xlu0 %64, %v55
    %v66 = vpop.permute.xlu0 %65
    %v69 = vlaneseq
    %v70 = vshrl.u32 %v69, 7
    %v71 = vsub.s32 0, %v70
    %v72 = vrot.slane %v56, %v71
    %v74 = vmul.f32 %v66, %v72
    %v76 = vlaneseq
    %v77 = vshrl.u32 %v76, 7
    %v78 = vsub.s32 0, %v77
    %v79 = vrot.slane %v59, %v78
    %v81 = vadd.f32 %v74, %v79
    %v82 = vtanh.pop %v81
    %83 = vset.pattern.permute.xlu0 1
    %84 = vperm.xlu0 %83, %v55
    %v85 = vpop.permute.xlu0 %84
    %v87 = vmul.f32 %v85, %v72
    %v88 = vadd.f32 %v87, %v79
    %vm89 = vcmask 162816
    %v91 = vsel %vm89, %v82, 0
    %v94 = vsel %vm89, %v60, 0
    %v97 = vsel %vm89, %v61, 0
    %v100 = vsel %vm89, %v62, 0
    %102 = vmatprep.subr.mxu0 0.0
    %103 = vmatpush1.xpose.msra.mxu0 0.0
    %104 = vmatprep.subr.mxu0 0.0
    %105 = vmatpush1.xpose.msra.mxu0 0.0
    %106 = vmatprep.subr.mxu0 0.0
    %107 = vmatpush1.xpose.msra.mxu0 0.0
    %108 = vmatprep.subr.mxu0 0.0
    %109 = vmatpush1.xpose.msra.mxu0 0.0
    %110 = vmatprep.subr.mxu0 0.0
    %111 = vmatpush1.xpose.msra.mxu0 0.0
    %112 = vmatprep.subr.mxu0 0.0
    %113 = vmatpush1.xpose.msra.mxu0 0.0
    %114 = vmatprep.subr.mxu0 0.0
    %115 = vmatpush1.xpose.msra.mxu0 0.0
    %116 = vmatprep.subr.mxu0 0.0
    %117 = vmatpush1.xpose.msra.mxu0 0.0
    %118 = vmatprep.subr.mxu0 0.0
    %119 = vmatpush1.xpose.msra.mxu0 0.0
    %120 = vmatprep.subr.mxu0 0.0
    %121 = vmatpush1.xpose.msra.mxu0 0.0
    %122 = vmatprep.subr.mxu0 0.0
    %123 = vmatpush1.xpose.msra.mxu0 0.0
    %124 = vmatprep.subr.mxu0 0.0
    %125 = vmatpush1.xpose.msra.mxu0 0.0
    %126 = vmatprep.subr.mxu0 0.0
    %127 = vmatpush1.xpose.msra.mxu0 0.0
    %128 = vmatprep.subr.mxu0 0.0
    %129 = vmatpush1.xpose.msra.mxu0 %v100
    %130 = vmatprep.subr.mxu0 0.0
    %131 = vmatpush1.xpose.msra.mxu0 %v97
    %132 = vmatprep.subr.mxu0 0.0
    %133 = vmatpush1.xpose.msra.mxu0 %v94
    %134 = vmatprep.subr.mxu0 0.0
    %135 = vmatpush2.xpose.msra.mxu0 0.0
    %136 = vmatprep.subr.mxu0 0.0
    %137 = vmatpush2.xpose.msra.mxu0 0.0
    %138 = vmatprep.subr.mxu0 0.0
    %139 = vmatpush2.xpose.msra.mxu0 0.0
    %140 = vmatprep.subr.mxu0 0.0
    %141 = vmatpush2.xpose.msra.mxu0 0.0
    %142 = vmatprep.subr.mxu0 0.0
    %143 = vmatpush2.xpose.msra.mxu0 0.0
    %144 = vmatprep.subr.mxu0 0.0
    %145 = vmatpush2.xpose.msra.mxu0 0.0
    %146 = vmatprep.subr.mxu0 0.0
    %147 = vmatpush2.xpose.msra.mxu0 0.0
    %148 = vmatprep.subr.mxu0 0.0
    %149 = vmatpush2.xpose.msra.mxu0 0.0
    %150 = vmatprep.subr.mxu0 0.0
    %151 = vmatpush2.xpose.msra.mxu0 0.0
    %152 = vmatprep.subr.mxu0 0.0
    %153 = vmatpush2.xpose.msra.mxu0 0.0
    %154 = vmatprep.subr.mxu0 0.0
    %155 = vmatpush2.xpose.msra.mxu0 0.0
    %156 = vmatprep.subr.mxu0 0.0
    %157 = vmatpush2.xpose.msra.mxu0 0.0
    %158 = vmatprep.subr.mxu0 0.0
    %159 = vmatpush2.xpose.msra.mxu0 0.0
    %160 = vmatprep.subr.mxu0 0.0
    %161 = vmatpush2.xpose.msra.mxu0 0.0
    %162 = vmatprep.subr.mxu0 0.0
    %163 = vmatpush2.xpose.msra.mxu0 0.0
    %164 = vmatprep.subr.mxu0 0.0
    %165 = vmatpush2.xpose.msra.mxu0 0.0
    %166 = vmatprep.mubr.f32.mxu0 0.0
    %167 = vmatmul.mubr.f32.gmra.mxu0 %v91
    %v168 = vpop.f32.mrf.mxu0
    %v169 = vadd.f32 0.0, %v168
    %v170 = vpop.f32.mrf.mxu0
    %171 = vdwg.mxu0
    %v172 = vadd.f32 %v88, %v169
    %v173 = vtanh.pop %v172
    %174 = vset.pattern.permute.xlu0 2
    %175 = vperm.xlu0 %174, %v55
    %v176 = vpop.permute.xlu0 %175
    %v178 = vmul.f32 %v176, %v72
    %v179 = vadd.f32 %v178, %v79
    %v181 = vsel %vm89, %v173, 0
    %183 = vmatprep.subr.mxu0 0.0
    %184 = vmatpush1.xpose.msra.mxu0 0.0
    %185 = vmatprep.subr.mxu0 0.0
    %186 = vmatpush1.xpose.msra.mxu0 0.0
    %187 = vmatprep.subr.mxu0 0.0
    %188 = vmatpush1.xpose.msra.mxu0 0.0
    %189 = vmatprep.subr.mxu0 0.0
    %190 = vmatpush1.xpose.msra.mxu0 0.0
    %191 = vmatprep.subr.mxu0 0.0
    %192 = vmatpush1.xpose.msra.mxu0 0.0
    %193 = vmatprep.subr.mxu0 0.0
    %194 = vmatpush1.xpose.msra.mxu0 0.0
    %195 = vmatprep.subr.mxu0 0.0
    %196 = vmatpush1.xpose.msra.mxu0 0.0
    %197 = vmatprep.subr.mxu0 0.0
    %198 = vmatpush1.xpose.msra.mxu0 0.0
    %199 = vmatprep.subr.mxu0 0.0
    %200 = vmatpush1.xpose.msra.mxu0 0.0
    %201 = vmatprep.subr.mxu0 0.0
    %202 = vmatpush1.xpose.msra.mxu0 0.0
    %203 = vmatprep.subr.mxu0 0.0
    %204 = vmatpush1.xpose.msra.mxu0 0.0
    %205 = vmatprep.subr.mxu0 0.0
    %206 = vmatpush1.xpose.msra.mxu0 0.0
    %207 = vmatprep.subr.mxu0 0.0
    %208 = vmatpush1.xpose.msra.mxu0 0.0
    %209 = vmatprep.subr.mxu0 0.0
    %210 = vmatpush1.xpose.msra.mxu0 %v100
    %211 = vmatprep.subr.mxu0 0.0
    %212 = vmatpush1.xpose.msra.mxu0 %v97
    %213 = vmatprep.subr.mxu0 0.0
    %214 = vmatpush1.xpose.msra.mxu0 %v94
    %215 = vmatprep.subr.mxu0 0.0
    %216 = vmatpush2.xpose.msra.mxu0 0.0
    %217 = vmatprep.subr.mxu0 0.0
    %218 = vmatpush2.xpose.msra.mxu0 0.0
    %219 = vmatprep.subr.mxu0 0.0
    %220 = vmatpush2.xpose.msra.mxu0 0.0
    %221 = vmatprep.subr.mxu0 0.0
    %222 = vmatpush2.xpose.msra.mxu0 0.0
    %223 = vmatprep.subr.mxu0 0.0
    %224 = vmatpush2.xpose.msra.mxu0 0.0
    %225 = vmatprep.subr.mxu0 0.0
    %226 = vmatpush2.xpose.msra.mxu0 0.0
    %227 = vmatprep.subr.mxu0 0.0
    %228 = vmatpush2.xpose.msra.mxu0 0.0
    %229 = vmatprep.subr.mxu0 0.0
    %230 = vmatpush2.xpose.msra.mxu0 0.0
    %231 = vmatprep.subr.mxu0 0.0
    %232 = vmatpush2.xpose.msra.mxu0 0.0
    %233 = vmatprep.subr.mxu0 0.0
    %234 = vmatpush2.xpose.msra.mxu0 0.0
    %235 = vmatprep.subr.mxu0 0.0
    %236 = vmatpush2.xpose.msra.mxu0 0.0
    %237 = vmatprep.subr.mxu0 0.0
    %238 = vmatpush2.xpose.msra.mxu0 0.0
    %239 = vmatprep.subr.mxu0 0.0
    %240 = vmatpush2.xpose.msra.mxu0 0.0
    %241 = vmatprep.subr.mxu0 0.0
    %242 = vmatpush2.xpose.msra.mxu0 0.0
    %243 = vmatprep.subr.mxu0 0.0
    %244 = vmatpush2.xpose.msra.mxu0 0.0
    %245 = vmatprep.subr.mxu0 0.0
    %246 = vmatpush2.xpose.msra.mxu0 0.0
    %247 = vmatprep.mubr.f32.mxu0 0.0
    %248 = vmatmul.mubr.f32.gmra.mxu0 %v181
    %v249 = vpop.f32.mrf.mxu0
    %v250 = vadd.f32 0.0, %v249
    %v251 = vpop.f32.mrf.mxu0
    %252 = vdwg.mxu0
    %v253 = vadd.f32 %v179, %v250
    %v254 = vtanh.pop %v253
    %255 = vset.pattern.permute.xlu0 3
    %256 = vperm.xlu0 %255, %v55
    %v257 = vpop.permute.xlu0 %256
    %v259 = vmul.f32 %v257, %v72
    %v260 = vadd.f32 %v259, %v79
    %v262 = vsel %vm89, %v254, 0
    %264 = vmatprep.subr.mxu0 0.0
    %265 = vmatpush1.xpose.msra.mxu0 0.0
    %266 = vmatprep.subr.mxu0 0.0
    %267 = vmatpush1.xpose.msra.mxu0 0.0
    %268 = vmatprep.subr.mxu0 0.0
    %269 = vmatpush1.xpose.msra.mxu0 0.0
    %270 = vmatprep.subr.mxu0 0.0
    %271 = vmatpush1.xpose.msra.mxu0 0.0
    %272 = vmatprep.subr.mxu0 0.0
    %273 = vmatpush1.xpose.msra.mxu0 0.0
    %274 = vmatprep.subr.mxu0 0.0
    %275 = vmatpush1.xpose.msra.mxu0 0.0
    %276 = vmatprep.subr.mxu0 0.0
    %277 = vmatpush1.xpose.msra.mxu0 0.0
    %278 = vmatprep.subr.mxu0 0.0
    %279 = vmatpush1.xpose.msra.mxu0 0.0
    %280 = vmatprep.subr.mxu0 0.0
    %281 = vmatpush1.xpose.msra.mxu0 0.0
    %282 = vmatprep.subr.mxu0 0.0
    %283 = vmatpush1.xpose.msra.mxu0 0.0
    %284 = vmatprep.subr.mxu0 0.0
    %285 = vmatpush1.xpose.msra.mxu0 0.0
    %286 = vmatprep.subr.mxu0 0.0
    %287 = vmatpush1.xpose.msra.mxu0 0.0
    %288 = vmatprep.subr.mxu0 0.0
    %289 = vmatpush1.xpose.msra.mxu0 0.0
    %290 = vmatprep.subr.mxu0 0.0
    %291 = vmatpush1.xpose.msra.mxu0 %v100
    %292 = vmatprep.subr.mxu0 0.0
    %293 = vmatpush1.xpose.msra.mxu0 %v97
    %294 = vmatprep.subr.mxu0 0.0
    %295 = vmatpush1.xpose.msra.mxu0 %v94
    %296 = vmatprep.subr.mxu0 0.0
    %297 = vmatpush2.xpose.msra.mxu0 0.0
    %298 = vmatprep.subr.mxu0 0.0
    %299 = vmatpush2.xpose.msra.mxu0 0.0
    %300 = vmatprep.subr.mxu0 0.0
    %301 = vmatpush2.xpose.msra.mxu0 0.0
    %302 = vmatprep.subr.mxu0 0.0
    %303 = vmatpush2.xpose.msra.mxu0 0.0
    %304 = vmatprep.subr.mxu0 0.0
    %305 = vmatpush2.xpose.msra.mxu0 0.0
    %306 = vmatprep.subr.mxu0 0.0
    %307 = vmatpush2.xpose.msra.mxu0 0.0
    %308 = vmatprep.subr.mxu0 0.0
    %309 = vmatpush2.xpose.msra.mxu0 0.0
    %310 = vmatprep.subr.mxu0 0.0
    %311 = vmatpush2.xpose.msra.mxu0 0.0
    %312 = vmatprep.subr.mxu0 0.0
    %313 = vmatpush2.xpose.msra.mxu0 0.0
    %314 = vmatprep.subr.mxu0 0.0
    %315 = vmatpush2.xpose.msra.mxu0 0.0
    %316 = vmatprep.subr.mxu0 0.0
    %317 = vmatpush2.xpose.msra.mxu0 0.0
    %318 = vmatprep.subr.mxu0 0.0
    %319 = vmatpush2.xpose.msra.mxu0 0.0
    %320 = vmatprep.subr.mxu0 0.0
    %321 = vmatpush2.xpose.msra.mxu0 0.0
    %322 = vmatprep.subr.mxu0 0.0
    %323 = vmatpush2.xpose.msra.mxu0 0.0
    %324 = vmatprep.subr.mxu0 0.0
    %325 = vmatpush2.xpose.msra.mxu0 0.0
    %326 = vmatprep.subr.mxu0 0.0
    %327 = vmatpush2.xpose.msra.mxu0 0.0
    %328 = vmatprep.mubr.f32.mxu0 0.0
    %329 = vmatmul.mubr.f32.gmra.mxu0 %v262
    %v330 = vpop.f32.mrf.mxu0
    %v331 = vadd.f32 0.0, %v330
    %v332 = vpop.f32.mrf.mxu0
    %333 = vdwg.mxu0
    %v334 = vadd.f32 %v260, %v331
    %v335 = vtanh.pop %v334
    %336 = vset.pattern.permute.xlu0 4
    %337 = vperm.xlu0 %336, %v55
    %v338 = vpop.permute.xlu0 %337
    %v340 = vmul.f32 %v338, %v72
    %v341 = vadd.f32 %v340, %v79
    %v343 = vsel %vm89, %v335, 0
    %345 = vmatprep.subr.mxu0 0.0
    %346 = vmatpush1.xpose.msra.mxu0 0.0
    %347 = vmatprep.subr.mxu0 0.0
    %348 = vmatpush1.xpose.msra.mxu0 0.0
    %349 = vmatprep.subr.mxu0 0.0
    %350 = vmatpush1.xpose.msra.mxu0 0.0
    %351 = vmatprep.subr.mxu0 0.0
    %352 = vmatpush1.xpose.msra.mxu0 0.0
    %353 = vmatprep.subr.mxu0 0.0
    %354 = vmatpush1.xpose.msra.mxu0 0.0
    %355 = vmatprep.subr.mxu0 0.0
    %356 = vmatpush1.xpose.msra.mxu0 0.0
    %357 = vmatprep.subr.mxu0 0.0
    %358 = vmatpush1.xpose.msra.mxu0 0.0
    %359 = vmatprep.subr.mxu0 0.0
    %360 = vmatpush1.xpose.msra.mxu0 0.0
    %361 = vmatprep.subr.mxu0 0.0
    %362 = vmatpush1.xpose.msra.mxu0 0.0
    %363 = vmatprep.subr.mxu0 0.0
    %364 = vmatpush1.xpose.msra.mxu0 0.0
    %365 = vmatprep.subr.mxu0 0.0
    %366 = vmatpush1.xpose.msra.mxu0 0.0
    %367 = vmatprep.subr.mxu0 0.0
    %368 = vmatpush1.xpose.msra.mxu0 0.0
    %369 = vmatprep.subr.mxu0 0.0
    %370 = vmatpush1.xpose.msra.mxu0 0.0
    %371 = vmatprep.subr.mxu0 0.0
    %372 = vmatpush1.xpose.msra.mxu0 %v100
    %373 = vmatprep.subr.mxu0 0.0
    %374 = vmatpush1.xpose.msra.mxu0 %v97
    %375 = vmatprep.subr.mxu0 0.0
    %376 = vmatpush1.xpose.msra.mxu0 %v94
    %377 = vmatprep.subr.mxu0 0.0
    %378 = vmatpush2.xpose.msra.mxu0 0.0
    %379 = vmatprep.subr.mxu0 0.0
    %380 = vmatpush2.xpose.msra.mxu0 0.0
    %381 = vmatprep.subr.mxu0 0.0
    %382 = vmatpush2.xpose.msra.mxu0 0.0
    %383 = vmatprep.subr.mxu0 0.0
    %384 = vmatpush2.xpose.msra.mxu0 0.0
    %385 = vmatprep.subr.mxu0 0.0
    %386 = vmatpush2.xpose.msra.mxu0 0.0
    %387 = vmatprep.subr.mxu0 0.0
    %388 = vmatpush2.xpose.msra.mxu0 0.0
    %389 = vmatprep.subr.mxu0 0.0
    %390 = vmatpush2.xpose.msra.mxu0 0.0
    %391 = vmatprep.subr.mxu0 0.0
    %392 = vmatpush2.xpose.msra.mxu0 0.0
    %393 = vmatprep.subr.mxu0 0.0
    %394 = vmatpush2.xpose.msra.mxu0 0.0
    %395 = vmatprep.subr.mxu0 0.0
    %396 = vmatpush2.xpose.msra.mxu0 0.0
    %397 = vmatprep.subr.mxu0 0.0
    %398 = vmatpush2.xpose.msra.mxu0 0.0
    %399 = vmatprep.subr.mxu0 0.0
    %400 = vmatpush2.xpose.msra.mxu0 0.0
    %401 = vmatprep.subr.mxu0 0.0
    %402 = vmatpush2.xpose.msra.mxu0 0.0
    %403 = vmatprep.subr.mxu0 0.0
    %404 = vmatpush2.xpose.msra.mxu0 0.0
    %405 = vmatprep.subr.mxu0 0.0
    %406 = vmatpush2.xpose.msra.mxu0 0.0
    %407 = vmatprep.subr.mxu0 0.0
    %408 = vmatpush2.xpose.msra.mxu0 0.0
    %409 = vmatprep.mubr.f32.mxu0 0.0
    %410 = vmatmul.mubr.f32.gmra.mxu0 %v343
    %v411 = vpop.f32.mrf.mxu0
    %v412 = vadd.f32 0.0, %v411
    %v413 = vpop.f32.mrf.mxu0
    %414 = vdwg.mxu0
    %v415 = vadd.f32 %v341, %v412
    %v416 = vtanh.pop %v415
    %417 = vset.pattern.permute.xlu0 5
    %418 = vperm.xlu0 %417, %v55
    %v419 = vpop.permute.xlu0 %418
    %v421 = vmul.f32 %v419, %v72
    %v422 = vadd.f32 %v421, %v79
    %v424 = vsel %vm89, %v416, 0
    %426 = vmatprep.subr.mxu0 0.0
    %427 = vmatpush1.xpose.msra.mxu0 0.0
    %428 = vmatprep.subr.mxu0 0.0
    %429 = vmatpush1.xpose.msra.mxu0 0.0
    %430 = vmatprep.subr.mxu0 0.0
    %431 = vmatpush1.xpose.msra.mxu0 0.0
    %432 = vmatprep.subr.mxu0 0.0
    %433 = vmatpush1.xpose.msra.mxu0 0.0
    %434 = vmatprep.subr.mxu0 0.0
    %435 = vmatpush1.xpose.msra.mxu0 0.0
    %436 = vmatprep.subr.mxu0 0.0
    %437 = vmatpush1.xpose.msra.mxu0 0.0
    %438 = vmatprep.subr.mxu0 0.0
    %439 = vmatpush1.xpose.msra.mxu0 0.0
    %440 = vmatprep.subr.mxu0 0.0
    %441 = vmatpush1.xpose.msra.mxu0 0.0
    %442 = vmatprep.subr.mxu0 0.0
    %443 = vmatpush1.xpose.msra.mxu0 0.0
    %444 = vmatprep.subr.mxu0 0.0
    %445 = vmatpush1.xpose.msra.mxu0 0.0
    %446 = vmatprep.subr.mxu0 0.0
    %447 = vmatpush1.xpose.msra.mxu0 0.0
    %448 = vmatprep.subr.mxu0 0.0
    %449 = vmatpush1.xpose.msra.mxu0 0.0
    %450 = vmatprep.subr.mxu0 0.0
    %451 = vmatpush1.xpose.msra.mxu0 0.0
    %452 = vmatprep.subr.mxu0 0.0
    %453 = vmatpush1.xpose.msra.mxu0 %v100
    %454 = vmatprep.subr.mxu0 0.0
    %455 = vmatpush1.xpose.msra.mxu0 %v97
    %456 = vmatprep.subr.mxu0 0.0
    %457 = vmatpush1.xpose.msra.mxu0 %v94
    %458 = vmatprep.subr.mxu0 0.0
    %459 = vmatpush2.xpose.msra.mxu0 0.0
    %460 = vmatprep.subr.mxu0 0.0
    %461 = vmatpush2.xpose.msra.mxu0 0.0
    %462 = vmatprep.subr.mxu0 0.0
    %463 = vmatpush2.xpose.msra.mxu0 0.0
    %464 = vmatprep.subr.mxu0 0.0
    %465 = vmatpush2.xpose.msra.mxu0 0.0
    %466 = vmatprep.subr.mxu0 0.0
    %467 = vmatpush2.xpose.msra.mxu0 0.0
    %468 = vmatprep.subr.mxu0 0.0
    %469 = vmatpush2.xpose.msra.mxu0 0.0
    %470 = vmatprep.subr.mxu0 0.0
    %471 = vmatpush2.xpose.msra.mxu0 0.0
    %472 = vmatprep.subr.mxu0 0.0
    %473 = vmatpush2.xpose.msra.mxu0 0.0
    %474 = vmatprep.subr.mxu0 0.0
    %475 = vmatpush2.xpose.msra.mxu0 0.0
    %476 = vmatprep.subr.mxu0 0.0
    %477 = vmatpush2.xpose.msra.mxu0 0.0
    %478 = vmatprep.subr.mxu0 0.0
    %479 = vmatpush2.xpose.msra.mxu0 0.0
    %480 = vmatprep.subr.mxu0 0.0
    %481 = vmatpush2.xpose.msra.mxu0 0.0
    %482 = vmatprep.subr.mxu0 0.0
    %483 = vmatpush2.xpose.msra.mxu0 0.0
    %484 = vmatprep.subr.mxu0 0.0
    %485 = vmatpush2.xpose.msra.mxu0 0.0
    %486 = vmatprep.subr.mxu0 0.0
    %487 = vmatpush2.xpose.msra.mxu0 0.0
    %488 = vmatprep.subr.mxu0 0.0
    %489 = vmatpush2.xpose.msra.mxu0 0.0
    %490 = vmatprep.mubr.f32.mxu0 0.0
    %491 = vmatmul.mubr.f32.gmra.mxu0 %v424
    %v492 = vpop.f32.mrf.mxu0
    %v493 = vadd.f32 0.0, %v492
    %v494 = vpop.f32.mrf.mxu0
    %495 = vdwg.mxu0
    %v496 = vadd.f32 %v422, %v493
    %v497 = vtanh.pop %v496
    %498 = vset.pattern.permute.xlu0 6
    %499 = vperm.xlu0 %498, %v55
    %v500 = vpop.permute.xlu0 %499
    %v502 = vmul.f32 %v500, %v72
    %v503 = vadd.f32 %v502, %v79
    %v505 = vsel %vm89, %v497, 0
    %507 = vmatprep.subr.mxu0 0.0
    %508 = vmatpush1.xpose.msra.mxu0 0.0
    %509 = vmatprep.subr.mxu0 0.0
    %510 = vmatpush1.xpose.msra.mxu0 0.0
    %511 = vmatprep.subr.mxu0 0.0
    %512 = vmatpush1.xpose.msra.mxu0 0.0
    %513 = vmatprep.subr.mxu0 0.0
    %514 = vmatpush1.xpose.msra.mxu0 0.0
    %515 = vmatprep.subr.mxu0 0.0
    %516 = vmatpush1.xpose.msra.mxu0 0.0
    %517 = vmatprep.subr.mxu0 0.0
    %518 = vmatpush1.xpose.msra.mxu0 0.0
    %519 = vmatprep.subr.mxu0 0.0
    %520 = vmatpush1.xpose.msra.mxu0 0.0
    %521 = vmatprep.subr.mxu0 0.0
    %522 = vmatpush1.xpose.msra.mxu0 0.0
    %523 = vmatprep.subr.mxu0 0.0
    %524 = vmatpush1.xpose.msra.mxu0 0.0
    %525 = vmatprep.subr.mxu0 0.0
    %526 = vmatpush1.xpose.msra.mxu0 0.0
    %527 = vmatprep.subr.mxu0 0.0
    %528 = vmatpush1.xpose.msra.mxu0 0.0
    %529 = vmatprep.subr.mxu0 0.0
    %530 = vmatpush1.xpose.msra.mxu0 0.0
    %531 = vmatprep.subr.mxu0 0.0
    %532 = vmatpush1.xpose.msra.mxu0 0.0
    %533 = vmatprep.subr.mxu0 0.0
    %534 = vmatpush1.xpose.msra.mxu0 %v100
    %535 = vmatprep.subr.mxu0 0.0
    %536 = vmatpush1.xpose.msra.mxu0 %v97
    %537 = vmatprep.subr.mxu0 0.0
    %538 = vmatpush1.xpose.msra.mxu0 %v94
    %539 = vmatprep.subr.mxu0 0.0
    %540 = vmatpush2.xpose.msra.mxu0 0.0
    %541 = vmatprep.subr.mxu0 0.0
    %542 = vmatpush2.xpose.msra.mxu0 0.0
    %543 = vmatprep.subr.mxu0 0.0
    %544 = vmatpush2.xpose.msra.mxu0 0.0
    %545 = vmatprep.subr.mxu0 0.0
    %546 = vmatpush2.xpose.msra.mxu0 0.0
    %547 = vmatprep.subr.mxu0 0.0
    %548 = vmatpush2.xpose.msra.mxu0 0.0
    %549 = vmatprep.subr.mxu0 0.0
    %550 = vmatpush2.xpose.msra.mxu0 0.0
    %551 = vmatprep.subr.mxu0 0.0
    %552 = vmatpush2.xpose.msra.mxu0 0.0
    %553 = vmatprep.subr.mxu0 0.0
    %554 = vmatpush2.xpose.msra.mxu0 0.0
    %555 = vmatprep.subr.mxu0 0.0
    %556 = vmatpush2.xpose.msra.mxu0 0.0
    %557 = vmatprep.subr.mxu0 0.0
    %558 = vmatpush2.xpose.msra.mxu0 0.0
    %559 = vmatprep.subr.mxu0 0.0
    %560 = vmatpush2.xpose.msra.mxu0 0.0
    %561 = vmatprep.subr.mxu0 0.0
    %562 = vmatpush2.xpose.msra.mxu0 0.0
    %563 = vmatprep.subr.mxu0 0.0
    %564 = vmatpush2.xpose.msra.mxu0 0.0
    %565 = vmatprep.subr.mxu0 0.0
    %566 = vmatpush2.xpose.msra.mxu0 0.0
    %567 = vmatprep.subr.mxu0 0.0
    %568 = vmatpush2.xpose.msra.mxu0 0.0
    %569 = vmatprep.subr.mxu0 0.0
    %570 = vmatpush2.xpose.msra.mxu0 0.0
    %571 = vmatprep.mubr.f32.mxu0 0.0
    %572 = vmatmul.mubr.f32.gmra.mxu0 %v505
    %v573 = vpop.f32.mrf.mxu0
    %v574 = vadd.f32 0.0, %v573
    %v575 = vpop.f32.mrf.mxu0
    %576 = vdwg.mxu0
    %v577 = vadd.f32 %v503, %v574
    %v578 = vtanh.pop %v577
    %579 = vset.pattern.permute.xlu0 7
    %580 = vperm.xlu0 %579, %v55
    %v581 = vpop.permute.xlu0 %580
    %v583 = vmul.f32 %v581, %v72
    %v584 = vadd.f32 %v583, %v79
    %v586 = vsel %vm89, %v578, 0
    %588 = vmatprep.subr.mxu0 0.0
    %589 = vmatpush1.xpose.msra.mxu0 0.0
    %590 = vmatprep.subr.mxu0 0.0
    %591 = vmatpush1.xpose.msra.mxu0 0.0
    %592 = vmatprep.subr.mxu0 0.0
    %593 = vmatpush1.xpose.msra.mxu0 0.0
    %594 = vmatprep.subr.mxu0 0.0
    %595 = vmatpush1.xpose.msra.mxu0 0.0
    %596 = vmatprep.subr.mxu0 0.0
    %597 = vmatpush1.xpose.msra.mxu0 0.0
    %598 = vmatprep.subr.mxu0 0.0
    %599 = vmatpush1.xpose.msra.mxu0 0.0
    %600 = vmatprep.subr.mxu0 0.0
    %601 = vmatpush1.xpose.msra.mxu0 0.0
    %602 = vmatprep.subr.mxu0 0.0
    %603 = vmatpush1.xpose.msra.mxu0 0.0
    %604 = vmatprep.subr.mxu0 0.0
    %605 = vmatpush1.xpose.msra.mxu0 0.0
    %606 = vmatprep.subr.mxu0 0.0
    %607 = vmatpush1.xpose.msra.mxu0 0.0
    %608 = vmatprep.subr.mxu0 0.0
    %609 = vmatpush1.xpose.msra.mxu0 0.0
    %610 = vmatprep.subr.mxu0 0.0
    %611 = vmatpush1.xpose.msra.mxu0 0.0
    %612 = vmatprep.subr.mxu0 0.0
    %613 = vmatpush1.xpose.msra.mxu0 0.0
    %614 = vmatprep.subr.mxu0 0.0
    %615 = vmatpush1.xpose.msra.mxu0 %v100
    %616 = vmatprep.subr.mxu0 0.0
    %617 = vmatpush1.xpose.msra.mxu0 %v97
    %618 = vmatprep.subr.mxu0 0.0
    %619 = vmatpush1.xpose.msra.mxu0 %v94
    %620 = vmatprep.subr.mxu0 0.0
    %621 = vmatpush2.xpose.msra.mxu0 0.0
    %622 = vmatprep.subr.mxu0 0.0
    %623 = vmatpush2.xpose.msra.mxu0 0.0
    %624 = vmatprep.subr.mxu0 0.0
    %625 = vmatpush2.xpose.msra.mxu0 0.0
    %626 = vmatprep.subr.mxu0 0.0
    %627 = vmatpush2.xpose.msra.mxu0 0.0
    %628 = vmatprep.subr.mxu0 0.0
    %629 = vmatpush2.xpose.msra.mxu0 0.0
    %630 = vmatprep.subr.mxu0 0.0
    %631 = vmatpush2.xpose.msra.mxu0 0.0
    %632 = vmatprep.subr.mxu0 0.0
    %633 = vmatpush2.xpose.msra.mxu0 0.0
    %634 = vmatprep.subr.mxu0 0.0
    %635 = vmatpush2.xpose.msra.mxu0 0.0
    %636 = vmatprep.subr.mxu0 0.0
    %637 = vmatpush2.xpose.msra.mxu0 0.0
    %638 = vmatprep.subr.mxu0 0.0
    %639 = vmatpush2.xpose.msra.mxu0 0.0
    %640 = vmatprep.subr.mxu0 0.0
    %641 = vmatpush2.xpose.msra.mxu0 0.0
    %642 = vmatprep.subr.mxu0 0.0
    %643 = vmatpush2.xpose.msra.mxu0 0.0
    %644 = vmatprep.subr.mxu0 0.0
    %645 = vmatpush2.xpose.msra.mxu0 0.0
    %646 = vmatprep.subr.mxu0 0.0
    %647 = vmatpush2.xpose.msra.mxu0 0.0
    %648 = vmatprep.subr.mxu0 0.0
    %649 = vmatpush2.xpose.msra.mxu0 0.0
    %650 = vmatprep.subr.mxu0 0.0
    %651 = vmatpush2.xpose.msra.mxu0 0.0
    %652 = vmatprep.mubr.f32.mxu0 0.0
    %653 = vmatmul.mubr.f32.gmra.mxu0 %v586
    %v654 = vpop.f32.mrf.mxu0
    %v655 = vadd.f32 0.0, %v654
    %v656 = vpop.f32.mrf.mxu0
    %657 = vdwg.mxu0
    %v658 = vadd.f32 %v584, %v655
    %v659 = vtanh.pop %v658
    %v660 = vld [vmem:[%s5] sm:$0x1]
    %v661 = vld [vmem:[#allocation2] sm:$0x1]
    %663 = vset.pattern.permute.xlu0 0
    %664 = vperm.xlu0 %663, %v661
    %v665 = vpop.permute.xlu0 %664
    %v667 = vlaneseq
    %v668 = vshrl.u32 %v667, 7
    %v669 = vsub.s32 0, %v668
    %v670 = vrot.slane %v665, %v669
    %v672 = vsel %vm89, %v660, 0
    %v675 = vsel %vm89, %v659, 0
    %677 = vmatprep.subr.mxu0 0.0
    %678 = vmatpush1.xpose.msra.mxu0 0.0
    %679 = vmatprep.subr.mxu0 0.0
    %680 = vmatpush1.xpose.msra.mxu0 0.0
    %681 = vmatprep.subr.mxu0 0.0
    %682 = vmatpush1.xpose.msra.mxu0 0.0
    %683 = vmatprep.subr.mxu0 0.0
    %684 = vmatpush1.xpose.msra.mxu0 0.0
    %685 = vmatprep.subr.mxu0 0.0
    %686 = vmatpush1.xpose.msra.mxu0 0.0
    %687 = vmatprep.subr.mxu0 0.0
    %688 = vmatpush1.xpose.msra.mxu0 0.0
    %689 = vmatprep.subr.mxu0 0.0
    %690 = vmatpush1.xpose.msra.mxu0 0.0
    %691 = vmatprep.subr.mxu0 0.0
    %692 = vmatpush1.xpose.msra.mxu0 0.0
    %693 = vmatprep.subr.mxu0 0.0
    %694 = vmatpush1.xpose.msra.mxu0 0.0
    %695 = vmatprep.subr.mxu0 0.0
    %696 = vmatpush1.xpose.msra.mxu0 0.0
    %697 = vmatprep.subr.mxu0 0.0
    %698 = vmatpush1.xpose.msra.mxu0 0.0
    %699 = vmatprep.subr.mxu0 0.0
    %700 = vmatpush1.xpose.msra.mxu0 0.0
    %701 = vmatprep.subr.mxu0 0.0
    %702 = vmatpush1.xpose.msra.mxu0 0.0
    %703 = vmatprep.subr.mxu0 0.0
    %704 = vmatpush1.xpose.msra.mxu0 0.0
    %705 = vmatprep.subr.mxu0 0.0
    %706 = vmatpush1.xpose.msra.mxu0 0.0
    %707 = vmatprep.subr.mxu0 0.0
    %708 = vmatpush1.xpose.msra.mxu0 %v675
    %709 = vmatprep.subr.mxu0 0.0
    %710 = vmatpush2.xpose.msra.mxu0 0.0
    %711 = vmatprep.subr.mxu0 0.0
    %712 = vmatpush2.xpose.msra.mxu0 0.0
    %713 = vmatprep.subr.mxu0 0.0
    %714 = vmatpush2.xpose.msra.mxu0 0.0
    %715 = vmatprep.subr.mxu0 0.0
    %716 = vmatpush2.xpose.msra.mxu0 0.0
    %717 = vmatprep.subr.mxu0 0.0
    %718 = vmatpush2.xpose.msra.mxu0 0.0
    %719 = vmatprep.subr.mxu0 0.0
    %720 = vmatpush2.xpose.msra.mxu0 0.0
    %721 = vmatprep.subr.mxu0 0.0
    %722 = vmatpush2.xpose.msra.mxu0 0.0
    %723 = vmatprep.subr.mxu0 0.0
    %724 = vmatpush2.xpose.msra.mxu0 0.0
    %725 = vmatprep.subr.mxu0 0.0
    %726 = vmatpush2.xpose.msra.mxu0 0.0
    %727 = vmatprep.subr.mxu0 0.0
    %728 = vmatpush2.xpose.msra.mxu0 0.0
    %729 = vmatprep.subr.mxu0 0.0
    %730 = vmatpush2.xpose.msra.mxu0 0.0
    %731 = vmatprep.subr.mxu0 0.0
    %732 = vmatpush2.xpose.msra.mxu0 0.0
    %733 = vmatprep.subr.mxu0 0.0
    %734 = vmatpush2.xpose.msra.mxu0 0.0
    %735 = vmatprep.subr.mxu0 0.0
    %736 = vmatpush2.xpose.msra.mxu0 0.0
    %737 = vmatprep.subr.mxu0 0.0
    %738 = vmatpush2.xpose.msra.mxu0 0.0
    %739 = vmatprep.subr.mxu0 0.0
    %740 = vmatpush2.xpose.msra.mxu0 0.0
    %741 = vmatprep.mubr.f32.mxu0 0.0
    %742 = vmatmul.mubr.f32.gmra.mxu0 %v672
    %v743 = vpop.f32.mrf.mxu0
    %v744 = vadd.f32 %v670, %v743
    %v745 = vpop.f32.mrf.mxu0
    %746 = vdwg.mxu0
    %vm747 = vcmask 57344
    %748 = vst.msk [vmem:[#allocation8] sm:$0x1] %vm747, %v744
    // Predicated region
    $region38: #{tpu_custom_call.1} parent=1 // pred_check
      _
    $region39: #{tpu_custom_call.1} parent=1 // pred_check_branch
      %750 = sbr.rel (0) target = $region41
    $region40: #{tpu_custom_call.1} parent=1 // pred_region
      %s752 = ssub.s32 16, 16
      %753 = vsyncadd [#allocation5], %s752
      %s755 = sshll.u32 [#allocation8], 4
      %s756 = int_to_ptr.vmem [resolvable:$true] %s755
      %758 = dma.vmem_to_hbm [thread:$0]  %s756, 16, %s7, [#allocation5]
    $region41: #{tpu_custom_call.1} parent=1 // pred_fallthru
      _
    // Predicated region
    $region42: #{tpu_custom_call.1} parent=1 // pred_check
      _
    $region43: #{tpu_custom_call.1} parent=1 // pred_check_branch
      %760 = sbr.rel (0) target = $region45
    $region44: #{tpu_custom_call.1} parent=1 // pred_region
      %761 = dma.done [#allocation5], 16
    $region45: #{tpu_custom_call.1} parent=1 // pred_fallthru
      _
    %762 = vsyncpa [#allocation4], 1
    %763 = vsyncpa [#allocation7], 1
    %764 = vsyncpa [#allocation5], 1

</llo_original>
